<compile_context>
chip_gen: v7x
topology: tpu7x:2x2x1
jax: 0.10.0
libtpu: 0.0.40
codegen_flags: <defaults>
</compile_context>

<pallas_src>
import jax
import jax.numpy as jnp
from jax.experimental import pallas as pl
from jax.experimental.pallas import tpu as pltpu


def _round_up(v, m):
    return ((v + m - 1) // m) * m


def relation_kernel(x_ref, w1_ref, b1_ref, w2_ref, b2_ref, o_ref):
    # x_ref: (TB, D) f32/bf16 ; w1_ref: (D, H) bf16 ; b1_ref: (1, H) f32
    # w2_ref: (H, Cp) bf16 ; b2_ref: (1, Cp) f32 ; o_ref: (TB, Cp) f32/bf16
    x = jnp.maximum(x_ref[...], 0.0).astype(jnp.bfloat16)          # nn.ReLU()
    h = jnp.dot(x, w1_ref[...], preferred_element_type=jnp.float32) + b1_ref[...]
    h = jnp.maximum(h, 0.0).astype(jnp.bfloat16)                    # nn.ReLU()
    out = jnp.dot(h, w2_ref[...], preferred_element_type=jnp.float32) + b2_ref[...]
    o_ref[...] = out.astype(o_ref.dtype)


def _choose_tile_b(B, tile_b=None, max_tile=1024):
    """Pick a batch tile: multiple of 8, 128..1024 rows, >=2 grid steps when B>=256."""
    if tile_b is not None:
        return max(8, _round_up(min(tile_b, _round_up(B, 8)), 8))
    B8 = _round_up(B, 8)
    if B8 <= 128:
        return B8                       # tiny batch: single small tile
    # Half the batch (128-aligned) so v7x's two TensorCores each get >=1 step,
    # capped at 1024 rows so per-step work dwarfs the ~0.35us pipeline overhead.
    return max(128, min(max_tile, _round_up(-(-B8 // 2), 128)))


def relation_module_forward(x, w1, b1, w2, b2, *, tile_b=None, out_dtype=None,
                            unpad=True):
    """x: (B, num_frames, img_feature_dim); w1: (D, H); b1: (H,)/(1,H);
    w2: (H, C); b2: (C,)/(1,C).  Returns (B, C) logits (or padded block if
    unpad=False)."""
    B = x.shape[0]
    D, H = w1.shape
    C = w2.shape[1]

    # Keep the producer's dtype (no standalone wrapper-side cast / HBM pass).
    x2d = x.reshape(B, D)
    if out_dtype is None:
        out_dtype = x2d.dtype

    b1 = jnp.asarray(b1, jnp.float32).reshape(1, H)
    b2 = jnp.asarray(b2, jnp.float32).reshape(1, C)

    tb = _choose_tile_b(B, tile_b)
    B_pad = _round_up(B, tb)
    if B_pad != B:
        x2d = jnp.pad(x2d, ((0, B_pad - B), (0, 0)))

    # Lane-dense output: pad classes to exactly one 128-lane group (not 256 —
    # the kernel is mem-bound, wider padding only wastes output traffic).
    C_pad = _round_up(C, 128)
    if C_pad != C:
        w2 = jnp.pad(w2, ((0, 0), (0, C_pad - C)))
        b2 = jnp.pad(b2, ((0, 0), (0, C_pad - C)))

    # bf16 matmul inputs for the MXU; accumulation stays f32 inside the kernel.
    w1b = jnp.asarray(w1, jnp.bfloat16)
    w2b = jnp.asarray(w2, jnp.bfloat16)

    grid = (B_pad // tb,)

    x_bytes = B_pad * D * x2d.dtype.itemsize
    out_bytes = B_pad * C_pad * jnp.dtype(out_dtype).itemsize
    cost = pl.CostEstimate(
        flops=2 * B_pad * (D * H + H * C_pad),
        transcendentals=0,
        bytes_accessed=(x_bytes + out_bytes
                        + w1b.size * 2 + w2b.size * 2 + b1.size * 4 + b2.size * 4),
    )

    out = pl.pallas_call(
        relation_kernel,
        out_shape=jax.ShapeDtypeStruct((B_pad, C_pad), out_dtype),
        grid_spec=pltpu.PrefetchScalarGridSpec(
            num_scalar_prefetch=0,
            grid=grid,
            in_specs=[
                pl.BlockSpec((tb, D), lambda i: (i, 0)),      # activations, batch-tiled
                # Constant index maps: Pallas keeps these weight/bias blocks
                # resident in VMEM across the whole batch grid (no re-DMA).
                pl.BlockSpec((D, H), lambda i: (0, 0)),        # W1
                pl.BlockSpec((1, H), lambda i: (0, 0)),        # b1
                pl.BlockSpec((H, C_pad), lambda i: (0, 0)),    # W2 (lane-padded)
                pl.BlockSpec((1, C_pad), lambda i: (0, 0)),    # b2
            ],
            out_specs=pl.BlockSpec((tb, C_pad), lambda i: (i, 0)),
        ),
        compiler_params=pltpu.CompilerParams(
            dimension_semantics=("parallel",)),
        cost_estimate=cost,
    )(x2d, w1b, b1, w2b, b2)

    if unpad:
        # Extra XLA pass over the padded output; set unpad=False and slice/mask
        # in the consumer when the downstream op can fuse it.
        return out[:B, :C]
    return out


if __name__ == "__main__":
    # Small shapes consistent with the module.
    batch = 8
    num_frames = 8
    img_feature_dim = 32
    num_class = 16
    num_bottleneck = 512
    D = num_frames * img_feature_dim  # 256

    key = jax.random.PRNGKey(0)
    kx, kw1, kb1, kw2, kb2 = jax.random.split(key, 5)

    # Deterministic synthetic parameters (shapes from nn.Linear in fc_fusion,
    # stored (in, out) i.e. transposed from PyTorch's (out, in)).
    x = jax.random.normal(kx, (batch, num_frames, img_feature_dim), dtype=jnp.float32)
    w1 = jax.random.normal(kw1, (D, num_bottleneck), dtype=jnp.float32) * 0.02
    b1 = jax.random.normal(kb1, (1, num_bottleneck), dtype=jnp.float32) * 0.02
    w2 = jax.random.normal(kw2, (num_bottleneck, num_class), dtype=jnp.float32) * 0.02
    b2 = jax.random.normal(kb2, (1, num_class), dtype=jnp.float32) * 0.02

    out = jax.block_until_ready(relation_module_forward(x, w1, b1, w2, b2))

    # Pure-JAX f32 reference of the same module math (kernel uses bf16 matmul
    # inputs with f32 accumulation -> tolerance loosened accordingly).
    xr = jnp.maximum(x.reshape(batch, D), 0.0)
    hr = jnp.maximum(xr @ w1 + b1, 0.0)
    ref = hr @ w2 + b2

    assert out.shape == (batch, num_class)
    err = float(jnp.max(jnp.abs(out - ref)))
    assert jnp.allclose(out, ref, atol=2e-2, rtol=2e-2), f"max abs err {err}"

    # Also exercise the low-traffic path: bf16 activations in, bf16 padded
    # logits out, no wrapper-side unpad slice.
    out_bf16 = jax.block_until_ready(
        relation_module_forward(x.astype(jnp.bfloat16), w1, b1, w2, b2,
                                unpad=False))
    assert out_bf16.shape == (batch, 128) and out_bf16.dtype == jnp.bfloat16
    assert bool(jnp.all(jnp.isfinite(out_bf16.astype(jnp.float32))))

    print("KERNEL_OK")
</pallas_src>

<mosaic_0001>
module attributes {stable_mosaic.version = 11 : i64} {
  func.func @relation_kernel(%arg0: i32, %arg1: memref<8x256xf32, #tpu.memory_space<vmem>>, %arg2: memref<256x512xbf16, #tpu.memory_space<vmem>>, %arg3: memref<1x512xf32, #tpu.memory_space<vmem>>, %arg4: memref<512x128xbf16, #tpu.memory_space<vmem>>, %arg5: memref<1x128xf32, #tpu.memory_space<vmem>>, %arg6: memref<8x128xf32, #tpu.memory_space<vmem>>) attributes {dimension_semantics = [#tpu.dimension_semantics<parallel>], iteration_bounds = array<i64: 1>, scalar_prefetch = 0 : i64, scratch_operands = 0 : i64, tpu.core_type = #tpu.core_type<tc>, window_params = [{transform_indices = @transform_0, window_bounds = array<i64: 8, 256>}, {pipeline_mode = #tpu.pipeline_mode<synchronous>, transform_indices = @transform_1, window_bounds = array<i64: 256, 512>}, {pipeline_mode = #tpu.pipeline_mode<synchronous>, transform_indices = @transform_2, window_bounds = array<i64: 1, 512>}, {pipeline_mode = #tpu.pipeline_mode<synchronous>, transform_indices = @transform_3, window_bounds = array<i64: 512, 128>}, {pipeline_mode = #tpu.pipeline_mode<synchronous>, transform_indices = @transform_4, window_bounds = array<i64: 1, 128>}, {transform_indices = @transform_5, window_bounds = array<i64: 8, 128>}]} {
    %c0 = arith.constant 0 : index
    %c0_0 = arith.constant 0 : index
    %0 = vector.load %arg1[%c0, %c0_0] : memref<8x256xf32, #tpu.memory_space<vmem>>, vector<8x256xf32>
    %cst = arith.constant 0.000000e+00 : f32
    %1 = vector.broadcast %cst : f32 to vector<8x256xf32>
    %2 = arith.maximumf %0, %1 : vector<8x256xf32>
    %3 = arith.truncf %2 : vector<8x256xf32> to vector<8x256xbf16>
    %c0_1 = arith.constant 0 : index
    %c0_2 = arith.constant 0 : index
    %4 = vector.load %arg2[%c0_1, %c0_2] : memref<256x512xbf16, #tpu.memory_space<vmem>>, vector<256x512xbf16>
    %cst_3 = arith.constant dense<0.000000e+00> : vector<8x512xf32>
    %5 = tpu.matmul %3, %4, %cst_3 {dimension_numbers = #tpu.dot_dimension_numbers<[1], [0], [0], [1], [0, 0, 1, 1], [], []>} : vector<8x256xbf16>, vector<256x512xbf16>, vector<8x512xf32> -> vector<8x512xf32>
    %c0_4 = arith.constant 0 : index
    %c0_5 = arith.constant 0 : index
    %6 = vector.load %arg3[%c0_4, %c0_5] : memref<1x512xf32, #tpu.memory_space<vmem>>, vector<1x512xf32>
    %7 = vector.broadcast %6 : vector<1x512xf32> to vector<8x512xf32>
    %8 = arith.addf %5, %7 : vector<8x512xf32>
    %cst_6 = arith.constant 0.000000e+00 : f32
    %9 = vector.broadcast %cst_6 : f32 to vector<8x512xf32>
    %10 = arith.maximumf %8, %9 : vector<8x512xf32>
    %11 = arith.truncf %10 : vector<8x512xf32> to vector<8x512xbf16>
    %c0_7 = arith.constant 0 : index
    %c0_8 = arith.constant 0 : index
    %12 = vector.load %arg4[%c0_7, %c0_8] : memref<512x128xbf16, #tpu.memory_space<vmem>>, vector<512x128xbf16>
    %cst_9 = arith.constant dense<0.000000e+00> : vector<8x128xf32>
    %13 = tpu.matmul %11, %12, %cst_9 {dimension_numbers = #tpu.dot_dimension_numbers<[1], [0], [0], [1], [0, 0, 1, 1], [], []>} : vector<8x512xbf16>, vector<512x128xbf16>, vector<8x128xf32> -> vector<8x128xf32>
    %c0_10 = arith.constant 0 : index
    %c0_11 = arith.constant 0 : index
    %14 = vector.load %arg5[%c0_10, %c0_11] : memref<1x128xf32, #tpu.memory_space<vmem>>, vector<1x128xf32>
    %15 = vector.broadcast %14 : vector<1x128xf32> to vector<8x128xf32>
    %16 = arith.addf %13, %15 : vector<8x128xf32>
    %c0_12 = arith.constant 0 : index
    %c0_13 = arith.constant 0 : index
    %17 = vector.load %arg6[%c0_12, %c0_13] : memref<8x128xf32, #tpu.memory_space<vmem>>, vector<8x128xf32>
    tpu.vector_store %arg6[%c0_12, %c0_13], %16 {strides = array<i32>} : memref<8x128xf32, #tpu.memory_space<vmem>>, vector<8x128xf32>,
    return
  }
  func.func @transform_0(%arg0: i32) -> (i32, i32) {
    %c0_i32 = arith.constant 0 : i32
    %c0_i32_0 = arith.constant 0 : i32
    return %arg0, %c0_i32 : i32, i32
  }
  func.func @transform_1(%arg0: i32) -> (i32, i32) {
    %c0_i32 = arith.constant 0 : i32
    %c0_i32_0 = arith.constant 0 : i32
    %c0_i32_1 = arith.constant 0 : i32
    return %c0_i32, %c0_i32_0 : i32, i32
  }
  func.func @transform_2(%arg0: i32) -> (i32, i32) {
    %c0_i32 = arith.constant 0 : i32
    %c0_i32_0 = arith.constant 0 : i32
    %c0_i32_1 = arith.constant 0 : i32
    return %c0_i32, %c0_i32_0 : i32, i32
  }
  func.func @transform_3(%arg0: i32) -> (i32, i32) {
    %c0_i32 = arith.constant 0 : i32
    %c0_i32_0 = arith.constant 0 : i32
    %c0_i32_1 = arith.constant 0 : i32
    return %c0_i32, %c0_i32_0 : i32, i32
  }
  func.func @transform_4(%arg0: i32) -> (i32, i32) {
    %c0_i32 = arith.constant 0 : i32
    %c0_i32_0 = arith.constant 0 : i32
    %c0_i32_1 = arith.constant 0 : i32
    return %c0_i32, %c0_i32_0 : i32, i32
  }
  func.func @transform_5(%arg0: i32) -> (i32, i32) {
    %c0_i32 = arith.constant 0 : i32
    %c0_i32_0 = arith.constant 0 : i32
    return %arg0, %c0_i32 : i32, i32
  }
}

</mosaic_0001>

<llo_original>
// kernel: tpu_custom_call.1
$region0: #{tpu_custom_call.1}
  #allocation0 [shape = 'u32[]', space=smem, size = 0x4, offset = 0x4, fixed_abs, tag = 'smem constant byte address 0x4 - core index']
  #allocation1 [shape = 'u32[144,128]{1,0:T(1,128)}', space=vmem, size = 0x12000, scoped, tag = 'internal scratch']
  %s0 = inlined_call_operand.hbm [shape: f32[8,256], index: 0, kind: input, shape index: {}]
  %s1 = inlined_call_operand.hbm [shape: bf16[256,512], index: 1, kind: input, shape index: {}]
  %s2 = inlined_call_operand.vmem [shape: f32[1,512], index: 2, kind: input, shape index: {}]
  %s3 = inlined_call_operand.hbm [shape: bf16[512,128], index: 3, kind: input, shape index: {}]
  %s4 = inlined_call_operand.vmem [shape: f32[1,128], index: 4, kind: input, shape index: {}]
  %s5 = inlined_call_operand.hbm [shape: f32[8,128], index: 5, kind: output, shape index: {}]
  %s6 = sld [smem:[#allocation0]]
  $region42: #{tpu_custom_call.1} parent=0
    _
  %s8 = ssub.s32 1, %s6
  %s9 = scalar_select 0, %s8, %s6
  $region1: #{tpu_custom_call.1} parent=0
    #allocation2 [shape = 'u8[8192]{0}', space=vmem, size = 0x2000, scoped, tag = 'input window, operand 0, single buffered']
    #allocation3 [shape = 's32[1]{0}', space=sflag, size = 0x4, scoped, tag = 'scoped memory for tpu_custom_call.1']
    #allocation4 [shape = 's32[1]{0}', space=sflag, size = 0x4, scoped, tag = 'scoped memory for tpu_custom_call.1']
    #allocation5 [shape = 'u8[262144]{0}', space=vmem, size = 0x40000, scoped, tag = 'input window, operand 1, single buffered']
    #allocation6 [shape = 's32[1]{0}', space=sflag, size = 0x4, scoped, tag = 'scoped memory for tpu_custom_call.1']
    #allocation7 [shape = 'u8[131072]{0}', space=vmem, size = 0x20000, scoped, tag = 'input window, operand 3, single buffered']
    #allocation8 [shape = 'u8[4096]{0}', space=vmem, size = 0x1000, scoped, tag = 'output window, operand 0, single buffered']
    %10 = vsyncpa [#allocation3], 0
    %11 = vsyncpa [#allocation6], 0
    %12 = vsyncpa [#allocation4], 0
    // Predicated region
    $region2: #{tpu_custom_call.1} parent=1 // pred_check
      _
    $region3: #{tpu_custom_call.1} parent=1 // pred_check_branch
      %14 = sbr.rel (0) target = $region5
    $region4: #{tpu_custom_call.1} parent=1 // pred_region
      %s16 = ssub.s32 256, 256
      %17 = vsyncadd [#allocation3], %s16
      %s19 = sshll.u32 [#allocation2], 4
      %s20 = int_to_ptr.vmem [resolvable:$true] %s19
      %22 = dma.hbm_to_vmem [thread:$0]  %s0, 256, %s20, [#allocation3]
    $region5: #{tpu_custom_call.1} parent=1 // pred_fallthru
      _
    // Predicated region
    $region6: #{tpu_custom_call.1} parent=1 // pred_check
      _
    $region7: #{tpu_custom_call.1} parent=1 // pred_check_branch
      %24 = sbr.rel (0) target = $region9
    $region8: #{tpu_custom_call.1} parent=1 // pred_region
      %s26 = ssub.s32 8192, 8192
      %27 = vsyncadd [#allocation6], %s26
      %s28 = sshll.u32 [#allocation5], 4
      %s29 = int_to_ptr.vmem [resolvable:$true] %s28
      %34 = dma.hbm_to_vmem [thread:$0]  %s1, 8192, %s29, [#allocation6], 256, 256, 16
    $region9: #{tpu_custom_call.1} parent=1 // pred_fallthru
      _
    // Predicated region
    $region10: #{tpu_custom_call.1} parent=1 // pred_check
      _
    $region11: #{tpu_custom_call.1} parent=1 // pred_check_branch
      %36 = sbr.rel (0) target = $region13
    $region12: #{tpu_custom_call.1} parent=1 // pred_region
      _
    $region13: #{tpu_custom_call.1} parent=1 // pred_fallthru
      _
    // Predicated region
    $region14: #{tpu_custom_call.1} parent=1 // pred_check
      _
    $region15: #{tpu_custom_call.1} parent=1 // pred_check_branch
      %38 = sbr.rel (0) target = $region17
    $region16: #{tpu_custom_call.1} parent=1 // pred_region
      %s40 = ssub.s32 4096, 4096
      %41 = vsyncadd [#allocation6], %s40
      %s42 = sshll.u32 [#allocation7], 4
      %s43 = int_to_ptr.vmem [resolvable:$true] %s42
      %48 = dma.hbm_to_vmem [thread:$0]  %s3, 4096, %s43, [#allocation6], 64, 64, 4
    $region17: #{tpu_custom_call.1} parent=1 // pred_fallthru
      _
    // Predicated region
    $region18: #{tpu_custom_call.1} parent=1 // pred_check
      _
    $region19: #{tpu_custom_call.1} parent=1 // pred_check_branch
      %50 = sbr.rel (0) target = $region21
    $region20: #{tpu_custom_call.1} parent=1 // pred_region
      _
    $region21: #{tpu_custom_call.1} parent=1 // pred_fallthru
      _
    // Predicated region
    $region22: #{tpu_custom_call.1} parent=1 // pred_check
      _
    $region23: #{tpu_custom_call.1} parent=1 // pred_check_branch
      %52 = sbr.rel (0) target = $region25
    $region24: #{tpu_custom_call.1} parent=1 // pred_region
      %53 = dma.done [#allocation3], 256
    $region25: #{tpu_custom_call.1} parent=1 // pred_fallthru
      _
    // Predicated region
    $region26: #{tpu_custom_call.1} parent=1 // pred_check
      _
    $region27: #{tpu_custom_call.1} parent=1 // pred_check_branch
      %55 = sbr.rel (0) target = $region29
    $region28: #{tpu_custom_call.1} parent=1 // pred_region
      %56 = dma.done [#allocation6], 8192
    $region29: #{tpu_custom_call.1} parent=1 // pred_fallthru
      _
    // Predicated region
    $region30: #{tpu_custom_call.1} parent=1 // pred_check
      _
    $region31: #{tpu_custom_call.1} parent=1 // pred_check_branch
      %58 = sbr.rel (0) target = $region33
    $region32: #{tpu_custom_call.1} parent=1 // pred_region
      %59 = dma.done [#allocation6], 4096
    $region33: #{tpu_custom_call.1} parent=1 // pred_fallthru
      _
    %v61 = vld [vmem:[#allocation2] sm:$0xff]
    %v62 = vld [vmem:[#allocation2 + $0x8] sm:$0xff]
    %v63 = vmax.f32 %v61, 0.0
    %v64 = vmax.f32 %v62, 0.0
    %v65 = vpack.c.bf16 %v63, %v63
    %v66 = vpack.c.bf16 %v64, %v64
    %v67 = vld [vmem:[#allocation5] sm:$0xff]
    %v68 = vld [vmem:[#allocation5 + $0x8] sm:$0xff]
    %v69 = vld [vmem:[#allocation5 + $0x10] sm:$0xff]
    %v70 = vld [vmem:[#allocation5 + $0x18] sm:$0xff]
    %v71 = vld [vmem:[#allocation5 + $0x20] sm:$0xff]
    %v72 = vld [vmem:[#allocation5 + $0x28] sm:$0xff]
    %v73 = vld [vmem:[#allocation5 + $0x30] sm:$0xff]
    %v74 = vld [vmem:[#allocation5 + $0x38] sm:$0xff]
    %v75 = vld [vmem:[#allocation5 + $0x40] sm:$0xff]
    %v76 = vld [vmem:[#allocation5 + $0x48] sm:$0xff]
    %v77 = vld [vmem:[#allocation5 + $0x50] sm:$0xff]
    %v78 = vld [vmem:[#allocation5 + $0x58] sm:$0xff]
    %v79 = vld [vmem:[#allocation5 + $0x60] sm:$0xff]
    %v80 = vld [vmem:[#allocation5 + $0x68] sm:$0xff]
    %v81 = vld [vmem:[#allocation5 + $0x70] sm:$0xff]
    %v82 = vld [vmem:[#allocation5 + $0x78] sm:$0xff]
    %v83 = vld [vmem:[#allocation5 + $0x80] sm:$0xff]
    %v84 = vld [vmem:[#allocation5 + $0x88] sm:$0xff]
    %v85 = vld [vmem:[#allocation5 + $0x90] sm:$0xff]
    %v86 = vld [vmem:[#allocation5 + $0x98] sm:$0xff]
    %v87 = vld [vmem:[#allocation5 + $0xa0] sm:$0xff]
    %v88 = vld [vmem:[#allocation5 + $0xa8] sm:$0xff]
    %v89 = vld [vmem:[#allocation5 + $0xb0] sm:$0xff]
    %v90 = vld [vmem:[#allocation5 + $0xb8] sm:$0xff]
    %v91 = vld [vmem:[#allocation5 + $0xc0] sm:$0xff]
    %v92 = vld [vmem:[#allocation5 + $0xc8] sm:$0xff]
    %v93 = vld [vmem:[#allocation5 + $0xd0] sm:$0xff]
    %v94 = vld [vmem:[#allocation5 + $0xd8] sm:$0xff]
    %v95 = vld [vmem:[#allocation5 + $0xe0] sm:$0xff]
    %v96 = vld [vmem:[#allocation5 + $0xe8] sm:$0xff]
    %v97 = vld [vmem:[#allocation5 + $0xf0] sm:$0xff]
    %v98 = vld [vmem:[#allocation5 + $0xf8] sm:$0xff]
    %v99 = vld [vmem:[#allocation5 + $0x100] sm:$0xff]
    %v100 = vld [vmem:[#allocation5 + $0x108] sm:$0xff]
    %v101 = vld [vmem:[#allocation5 + $0x110] sm:$0xff]
    %v102 = vld [vmem:[#allocation5 + $0x118] sm:$0xff]
    %v103 = vld [vmem:[#allocation5 + $0x120] sm:$0xff]
    %v104 = vld [vmem:[#allocation5 + $0x128] sm:$0xff]
    %v105 = vld [vmem:[#allocation5 + $0x130] sm:$0xff]
    %v106 = vld [vmem:[#allocation5 + $0x138] sm:$0xff]
    %v107 = vld [vmem:[#allocation5 + $0x140] sm:$0xff]
    %v108 = vld [vmem:[#allocation5 + $0x148] sm:$0xff]
    %v109 = vld [vmem:[#allocation5 + $0x150] sm:$0xff]
    %v110 = vld [vmem:[#allocation5 + $0x158] sm:$0xff]
    %v111 = vld [vmem:[#allocation5 + $0x160] sm:$0xff]
    %v112 = vld [vmem:[#allocation5 + $0x168] sm:$0xff]
    %v113 = vld [vmem:[#allocation5 + $0x170] sm:$0xff]
    %v114 = vld [vmem:[#allocation5 + $0x178] sm:$0xff]
    %v115 = vld [vmem:[#allocation5 + $0x180] sm:$0xff]
    %v116 = vld [vmem:[#allocation5 + $0x188] sm:$0xff]
    %v117 = vld [vmem:[#allocation5 + $0x190] sm:$0xff]
    %v118 = vld [vmem:[#allocation5 + $0x198] sm:$0xff]
    %v119 = vld [vmem:[#allocation5 + $0x1a0] sm:$0xff]
    %v120 = vld [vmem:[#allocation5 + $0x1a8] sm:$0xff]
    %v121 = vld [vmem:[#allocation5 + $0x1b0] sm:$0xff]
    %v122 = vld [vmem:[#allocation5 + $0x1b8] sm:$0xff]
    %v123 = vld [vmem:[#allocation5 + $0x1c0] sm:$0xff]
    %v124 = vld [vmem:[#allocation5 + $0x1c8] sm:$0xff]
    %v125 = vld [vmem:[#allocation5 + $0x1d0] sm:$0xff]
    %v126 = vld [vmem:[#allocation5 + $0x1d8] sm:$0xff]
    %v127 = vld [vmem:[#allocation5 + $0x1e0] sm:$0xff]
    %v128 = vld [vmem:[#allocation5 + $0x1e8] sm:$0xff]
    %v129 = vld [vmem:[#allocation5 + $0x1f0] sm:$0xff]
    %v130 = vld [vmem:[#allocation5 + $0x1f8] sm:$0xff]
    %v131 = vld [vmem:[%s2] sm:$0xf]
    %v133 = vlaneseq
    %v134 = vshrl.u32 %v133, 7
    %v135 = vsub.s32 0, %v134
    %v136 = vrot.slane %v131, %v135
    %v137 = vlaneseq
    %v138 = vshrl.u32 %v137, 7
    %v139 = vsub.s32 1, %v138
    %v140 = vrot.slane %v131, %v139
    %v141 = vlaneseq
    %v142 = vshrl.u32 %v141, 7
    %v143 = vsub.s32 2, %v142
    %v144 = vrot.slane %v131, %v143
    %v145 = vlaneseq
    %v146 = vshrl.u32 %v145, 7
    %v147 = vsub.s32 3, %v146
    %v148 = vrot.slane %v131, %v147
    %v217 = vunpack.c.l.b16 %v67
    %v218 = vunpack.c.h.b16 %v67
    %v219 = vunpack.c.l.b16 %v68
    %v220 = vunpack.c.h.b16 %v68
    %v221 = vunpack.c.l.b16 %v69
    %v222 = vunpack.c.h.b16 %v69
    %v223 = vunpack.c.l.b16 %v70
    %v224 = vunpack.c.h.b16 %v70
    %v225 = vunpack.c.l.b16 %v71
    %v226 = vunpack.c.h.b16 %v71
    %v227 = vunpack.c.l.b16 %v72
    %v228 = vunpack.c.h.b16 %v72
    %v229 = vunpack.c.l.b16 %v73
    %v230 = vunpack.c.h.b16 %v73
    %v231 = vunpack.c.l.b16 %v74
    %v232 = vunpack.c.h.b16 %v74
    %v233 = vunpack.c.l.b16 %v75
    %v234 = vunpack.c.h.b16 %v75
    %v235 = vunpack.c.l.b16 %v76
    %v236 = vunpack.c.h.b16 %v76
    %v237 = vunpack.c.l.b16 %v77
    %v238 = vunpack.c.h.b16 %v77
    %v239 = vunpack.c.l.b16 %v78
    %v240 = vunpack.c.h.b16 %v78
    %v241 = vunpack.c.l.b16 %v79
    %v242 = vunpack.c.h.b16 %v79
    %v243 = vunpack.c.l.b16 %v80
    %v244 = vunpack.c.h.b16 %v80
    %v245 = vunpack.c.l.b16 %v81
    %v246 = vunpack.c.h.b16 %v81
    %v247 = vunpack.c.l.b16 %v82
    %v248 = vunpack.c.h.b16 %v82
    %v249 = vunpack.c.l.b16 %v83
    %v250 = vunpack.c.h.b16 %v83
    %v251 = vunpack.c.l.b16 %v84
    %v252 = vunpack.c.h.b16 %v84
    %v253 = vunpack.c.l.b16 %v85
    %v254 = vunpack.c.h.b16 %v85
    %v255 = vunpack.c.l.b16 %v86
    %v256 = vunpack.c.h.b16 %v86
    %v257 = vunpack.c.l.b16 %v87
    %v258 = vunpack.c.h.b16 %v87
    %v259 = vunpack.c.l.b16 %v88
    %v260 = vunpack.c.h.b16 %v88
    %v261 = vunpack.c.l.b16 %v89
    %v262 = vunpack.c.h.b16 %v89
    %v263 = vunpack.c.l.b16 %v90
    %v264 = vunpack.c.h.b16 %v90
    %v265 = vunpack.c.l.b16 %v91
    %v266 = vunpack.c.h.b16 %v91
    %v267 = vunpack.c.l.b16 %v92
    %v268 = vunpack.c.h.b16 %v92
    %v269 = vunpack.c.l.b16 %v93
    %v270 = vunpack.c.h.b16 %v93
    %v271 = vunpack.c.l.b16 %v94
    %v272 = vunpack.c.h.b16 %v94
    %v273 = vunpack.c.l.b16 %v95
    %v274 = vunpack.c.h.b16 %v95
    %v275 = vunpack.c.l.b16 %v96
    %v276 = vunpack.c.h.b16 %v96
    %v277 = vunpack.c.l.b16 %v97
    %v278 = vunpack.c.h.b16 %v97
    %v279 = vunpack.c.l.b16 %v98
    %v280 = vunpack.c.h.b16 %v98
    %v281 = vunpack.c.l.b16 %v99
    %v282 = vunpack.c.h.b16 %v99
    %v283 = vunpack.c.l.b16 %v100
    %v284 = vunpack.c.h.b16 %v100
    %v285 = vunpack.c.l.b16 %v101
    %v286 = vunpack.c.h.b16 %v101
    %v287 = vunpack.c.l.b16 %v102
    %v288 = vunpack.c.h.b16 %v102
    %v289 = vunpack.c.l.b16 %v103
    %v290 = vunpack.c.h.b16 %v103
    %v291 = vunpack.c.l.b16 %v104
    %v292 = vunpack.c.h.b16 %v104
    %v293 = vunpack.c.l.b16 %v105
    %v294 = vunpack.c.h.b16 %v105
    %v295 = vunpack.c.l.b16 %v106
    %v296 = vunpack.c.h.b16 %v106
    %v297 = vunpack.c.l.b16 %v107
    %v298 = vunpack.c.h.b16 %v107
    %v299 = vunpack.c.l.b16 %v108
    %v300 = vunpack.c.h.b16 %v108
    %v301 = vunpack.c.l.b16 %v109
    %v302 = vunpack.c.h.b16 %v109
    %v303 = vunpack.c.l.b16 %v110
    %v304 = vunpack.c.h.b16 %v110
    %v305 = vunpack.c.l.b16 %v111
    %v306 = vunpack.c.h.b16 %v111
    %v307 = vunpack.c.l.b16 %v112
    %v308 = vunpack.c.h.b16 %v112
    %v309 = vunpack.c.l.b16 %v113
    %v310 = vunpack.c.h.b16 %v113
    %v311 = vunpack.c.l.b16 %v114
    %v312 = vunpack.c.h.b16 %v114
    %v313 = vunpack.c.l.b16 %v115
    %v314 = vunpack.c.h.b16 %v115
    %v315 = vunpack.c.l.b16 %v116
    %v316 = vunpack.c.h.b16 %v116
    %v317 = vunpack.c.l.b16 %v117
    %v318 = vunpack.c.h.b16 %v117
    %v319 = vunpack.c.l.b16 %v118
    %v320 = vunpack.c.h.b16 %v118
    %v321 = vunpack.c.l.b16 %v119
    %v322 = vunpack.c.h.b16 %v119
    %v323 = vunpack.c.l.b16 %v120
    %v324 = vunpack.c.h.b16 %v120
    %v325 = vunpack.c.l.b16 %v121
    %v326 = vunpack.c.h.b16 %v121
    %v327 = vunpack.c.l.b16 %v122
    %v328 = vunpack.c.h.b16 %v122
    %v329 = vunpack.c.l.b16 %v123
    %v330 = vunpack.c.h.b16 %v123
    %v331 = vunpack.c.l.b16 %v124
    %v332 = vunpack.c.h.b16 %v124
    %v333 = vunpack.c.l.b16 %v125
    %v334 = vunpack.c.h.b16 %v125
    %v335 = vunpack.c.l.b16 %v126
    %v336 = vunpack.c.h.b16 %v126
    %v337 = vunpack.c.l.b16 %v127
    %v338 = vunpack.c.h.b16 %v127
    %v339 = vunpack.c.l.b16 %v128
    %v340 = vunpack.c.h.b16 %v128
    %v341 = vunpack.c.l.b16 %v129
    %v342 = vunpack.c.h.b16 %v129
    %v343 = vunpack.c.l.b16 %v130
    %v344 = vunpack.c.h.b16 %v130
    %v345 = vpack.c.b16 %v221, %v217
    %v346 = vpack.c.b16 %v222, %v218
    %v347 = vpack.c.b16 %v223, %v219
    %v348 = vpack.c.b16 %v224, %v220
    %v349 = vpack.c.b16 %v229, %v225
    %v350 = vpack.c.b16 %v230, %v226
    %v351 = vpack.c.b16 %v231, %v227
    %v352 = vpack.c.b16 %v232, %v228
    %v353 = vpack.c.b16 %v237, %v233
    %v354 = vpack.c.b16 %v238, %v234
    %v355 = vpack.c.b16 %v239, %v235
    %v356 = vpack.c.b16 %v240, %v236
    %v357 = vpack.c.b16 %v245, %v241
    %v358 = vpack.c.b16 %v246, %v242
    %v359 = vpack.c.b16 %v247, %v243
    %v360 = vpack.c.b16 %v248, %v244
    %v361 = vpack.c.b16 %v253, %v249
    %v362 = vpack.c.b16 %v254, %v250
    %v363 = vpack.c.b16 %v255, %v251
    %v364 = vpack.c.b16 %v256, %v252
    %v365 = vpack.c.b16 %v261, %v257
    %v366 = vpack.c.b16 %v262, %v258
    %v367 = vpack.c.b16 %v263, %v259
    %v368 = vpack.c.b16 %v264, %v260
    %v369 = vpack.c.b16 %v269, %v265
    %v370 = vpack.c.b16 %v270, %v266
    %v371 = vpack.c.b16 %v271, %v267
    %v372 = vpack.c.b16 %v272, %v268
    %v373 = vpack.c.b16 %v277, %v273
    %v374 = vpack.c.b16 %v278, %v274
    %v375 = vpack.c.b16 %v279, %v275
    %v376 = vpack.c.b16 %v280, %v276
    %v377 = vpack.c.b16 %v285, %v281
    %v378 = vpack.c.b16 %v286, %v282
    %v379 = vpack.c.b16 %v287, %v283
    %v380 = vpack.c.b16 %v288, %v284
    %v381 = vpack.c.b16 %v293, %v289
    %v382 = vpack.c.b16 %v294, %v290
    %v383 = vpack.c.b16 %v295, %v291
    %v384 = vpack.c.b16 %v296, %v292
    %v385 = vpack.c.b16 %v301, %v297
    %v386 = vpack.c.b16 %v302, %v298
    %v387 = vpack.c.b16 %v303, %v299
    %v388 = vpack.c.b16 %v304, %v300
    %v389 = vpack.c.b16 %v309, %v305
    %v390 = vpack.c.b16 %v310, %v306
    %v391 = vpack.c.b16 %v311, %v307
    %v392 = vpack.c.b16 %v312, %v308
    %v393 = vpack.c.b16 %v317, %v313
    %v394 = vpack.c.b16 %v318, %v314
    %v395 = vpack.c.b16 %v319, %v315
    %v396 = vpack.c.b16 %v320, %v316
    %v397 = vpack.c.b16 %v325, %v321
    %v398 = vpack.c.b16 %v326, %v322
    %v399 = vpack.c.b16 %v327, %v323
    %v400 = vpack.c.b16 %v328, %v324
    %v401 = vpack.c.b16 %v333, %v329
    %v402 = vpack.c.b16 %v334, %v330
    %v403 = vpack.c.b16 %v335, %v331
    %v404 = vpack.c.b16 %v336, %v332
    %v405 = vpack.c.b16 %v341, %v337
    %v406 = vpack.c.b16 %v342, %v338
    %v407 = vpack.c.b16 %v343, %v339
    %v408 = vpack.c.b16 %v344, %v340
    %473 = vmatprep.subr.bf16.mxu0 %v346
    %474 = vmatpush1.bf16.msra.mxu0 %v345
    %475 = vmatprep.subr.bf16.mxu0 %v350
    %476 = vmatpush1.bf16.msra.mxu0 %v349
    %477 = vmatprep.subr.bf16.mxu0 %v354
    %478 = vmatpush1.bf16.msra.mxu0 %v353
    %479 = vmatprep.subr.bf16.mxu0 %v358
    %480 = vmatpush1.bf16.msra.mxu0 %v357
    %481 = vmatprep.subr.bf16.mxu0 %v362
    %482 = vmatpush1.bf16.msra.mxu0 %v361
    %483 = vmatprep.subr.bf16.mxu0 %v366
    %484 = vmatpush1.bf16.msra.mxu0 %v365
    %485 = vmatprep.subr.bf16.mxu0 %v370
    %486 = vmatpush1.bf16.msra.mxu0 %v369
    %487 = vmatprep.subr.bf16.mxu0 %v374
    %488 = vmatpush1.bf16.msra.mxu0 %v373
    %489 = vmatprep.subr.bf16.mxu0 %v378
    %490 = vmatpush1.bf16.msra.mxu0 %v377
    %491 = vmatprep.subr.bf16.mxu0 %v382
    %492 = vmatpush1.bf16.msra.mxu0 %v381
    %493 = vmatprep.subr.bf16.mxu0 %v386
    %494 = vmatpush1.bf16.msra.mxu0 %v385
    %495 = vmatprep.subr.bf16.mxu0 %v390
    %496 = vmatpush1.bf16.msra.mxu0 %v389
    %497 = vmatprep.subr.bf16.mxu0 %v394
    %498 = vmatpush1.bf16.msra.mxu0 %v393
    %499 = vmatprep.subr.bf16.mxu0 %v398
    %500 = vmatpush1.bf16.msra.mxu0 %v397
    %501 = vmatprep.subr.bf16.mxu0 %v402
    %502 = vmatpush1.bf16.msra.mxu0 %v401
    %503 = vmatprep.subr.bf16.mxu0 %v406
    %504 = vmatpush1.bf16.msra.mxu0 %v405
    %505 = vmatprep.mubr.bf16.mxu0 %v66
    %506 = vmatmul.mubr.bf16.gmra.mrb[0].mxu0 %v65
    %v507 = vpop.f32.mrb[0].mxu0
    %v508 = vadd.f32 %v136, %v507
    %v509 = vpop.f32.mrb[0].mxu0
    %v510 = vadd.f32 %v140, %v509
    %v511 = vpop.f32.mrb[0].mxu0
    %v512 = vpop.f32.mrb[0].mxu0
    %513 = vdwg.mxu0
    %514 = vmatprep.subr.bf16.mxu0 %v348
    %515 = vmatpush1.bf16.msra.mxu0 %v347
    %516 = vmatprep.subr.bf16.mxu0 %v352
    %517 = vmatpush1.bf16.msra.mxu0 %v351
    %518 = vmatprep.subr.bf16.mxu0 %v356
    %519 = vmatpush1.bf16.msra.mxu0 %v355
    %520 = vmatprep.subr.bf16.mxu0 %v360
    %521 = vmatpush1.bf16.msra.mxu0 %v359
    %522 = vmatprep.subr.bf16.mxu0 %v364
    %523 = vmatpush1.bf16.msra.mxu0 %v363
    %524 = vmatprep.subr.bf16.mxu0 %v368
    %525 = vmatpush1.bf16.msra.mxu0 %v367
    %526 = vmatprep.subr.bf16.mxu0 %v372
    %527 = vmatpush1.bf16.msra.mxu0 %v371
    %528 = vmatprep.subr.bf16.mxu0 %v376
    %529 = vmatpush1.bf16.msra.mxu0 %v375
    %530 = vmatprep.subr.bf16.mxu0 %v380
    %531 = vmatpush1.bf16.msra.mxu0 %v379
    %532 = vmatprep.subr.bf16.mxu0 %v384
    %533 = vmatpush1.bf16.msra.mxu0 %v383
    %534 = vmatprep.subr.bf16.mxu0 %v388
    %535 = vmatpush1.bf16.msra.mxu0 %v387
    %536 = vmatprep.subr.bf16.mxu0 %v392
    %537 = vmatpush1.bf16.msra.mxu0 %v391
    %538 = vmatprep.subr.bf16.mxu0 %v396
    %539 = vmatpush1.bf16.msra.mxu0 %v395
    %540 = vmatprep.subr.bf16.mxu0 %v400
    %541 = vmatpush1.bf16.msra.mxu0 %v399
    %542 = vmatprep.subr.bf16.mxu0 %v404
    %543 = vmatpush1.bf16.msra.mxu0 %v403
    %544 = vmatprep.subr.bf16.mxu0 %v408
    %545 = vmatpush1.bf16.msra.mxu0 %v407
    %546 = vmatprep.mubr.bf16.mxu0 %v66
    %547 = vmatmul.mubr.bf16.gmra.mrb[0].mxu0 %v65
    %v548 = vpop.f32.mrb[0].mxu0
    %v549 = vadd.f32 %v144, %v548
    %v550 = vpop.f32.mrb[0].mxu0
    %v551 = vadd.f32 %v148, %v550
    %v552 = vpop.f32.mrb[0].mxu0
    %v553 = vpop.f32.mrb[0].mxu0
    %554 = vdwg.mxu0
    %v555 = vmax.f32 %v508, 0.0
    %v556 = vmax.f32 %v510, 0.0
    %v557 = vmax.f32 %v549, 0.0
    %v558 = vmax.f32 %v551, 0.0
    %v559 = vpack.c.bf16 %v555, %v555
    %v560 = vpack.c.bf16 %v556, %v556
    %v561 = vpack.c.bf16 %v557, %v557
    %v562 = vpack.c.bf16 %v558, %v558
    %v563 = vld [vmem:[#allocation7] sm:$0xf]
    %v564 = vld [vmem:[#allocation7 + $0x4] sm:$0xf]
    %v565 = vld [vmem:[#allocation7 + $0x8] sm:$0xf]
    %v566 = vld [vmem:[#allocation7 + $0xc] sm:$0xf]
    %v567 = vld [vmem:[#allocation7 + $0x10] sm:$0xf]
    %v568 = vld [vmem:[#allocation7 + $0x14] sm:$0xf]
    %v569 = vld [vmem:[#allocation7 + $0x18] sm:$0xf]
    %v570 = vld [vmem:[#allocation7 + $0x1c] sm:$0xf]
    %v571 = vld [vmem:[#allocation7 + $0x20] sm:$0xf]
    %v572 = vld [vmem:[#allocation7 + $0x24] sm:$0xf]
    %v573 = vld [vmem:[#allocation7 + $0x28] sm:$0xf]
    %v574 = vld [vmem:[#allocation7 + $0x2c] sm:$0xf]
    %v575 = vld [vmem:[#allocation7 + $0x30] sm:$0xf]
    %v576 = vld [vmem:[#allocation7 + $0x34] sm:$0xf]
    %v577 = vld [vmem:[#allocation7 + $0x38] sm:$0xf]
    %v578 = vld [vmem:[#allocation7 + $0x3c] sm:$0xf]
    %v579 = vld [vmem:[#allocation7 + $0x40] sm:$0xf]
    %v580 = vld [vmem:[#allocation7 + $0x44] sm:$0xf]
    %v581 = vld [vmem:[#allocation7 + $0x48] sm:$0xf]
    %v582 = vld [vmem:[#allocation7 + $0x4c] sm:$0xf]
    %v583 = vld [vmem:[#allocation7 + $0x50] sm:$0xf]
    %v584 = vld [vmem:[#allocation7 + $0x54] sm:$0xf]
    %v585 = vld [vmem:[#allocation7 + $0x58] sm:$0xf]
    %v586 = vld [vmem:[#allocation7 + $0x5c] sm:$0xf]
    %v587 = vld [vmem:[#allocation7 + $0x60] sm:$0xf]
    %v588 = vld [vmem:[#allocation7 + $0x64] sm:$0xf]
    %v589 = vld [vmem:[#allocation7 + $0x68] sm:$0xf]
    %v590 = vld [vmem:[#allocation7 + $0x6c] sm:$0xf]
    %v591 = vld [vmem:[#allocation7 + $0x70] sm:$0xf]
    %v592 = vld [vmem:[#allocation7 + $0x74] sm:$0xf]
    %v593 = vld [vmem:[#allocation7 + $0x78] sm:$0xf]
    %v594 = vld [vmem:[#allocation7 + $0x7c] sm:$0xf]
    %v595 = vld [vmem:[#allocation7 + $0x80] sm:$0xf]
    %v596 = vld [vmem:[#allocation7 + $0x84] sm:$0xf]
    %v597 = vld [vmem:[#allocation7 + $0x88] sm:$0xf]
    %v598 = vld [vmem:[#allocation7 + $0x8c] sm:$0xf]
    %v599 = vld [vmem:[#allocation7 + $0x90] sm:$0xf]
    %v600 = vld [vmem:[#allocation7 + $0x94] sm:$0xf]
    %v601 = vld [vmem:[#allocation7 + $0x98] sm:$0xf]
    %v602 = vld [vmem:[#allocation7 + $0x9c] sm:$0xf]
    %v603 = vld [vmem:[#allocation7 + $0xa0] sm:$0xf]
    %v604 = vld [vmem:[#allocation7 + $0xa4] sm:$0xf]
    %v605 = vld [vmem:[#allocation7 + $0xa8] sm:$0xf]
    %v606 = vld [vmem:[#allocation7 + $0xac] sm:$0xf]
    %v607 = vld [vmem:[#allocation7 + $0xb0] sm:$0xf]
    %v608 = vld [vmem:[#allocation7 + $0xb4] sm:$0xf]
    %v609 = vld [vmem:[#allocation7 + $0xb8] sm:$0xf]
    %v610 = vld [vmem:[#allocation7 + $0xbc] sm:$0xf]
    %v611 = vld [vmem:[#allocation7 + $0xc0] sm:$0xf]
    %v612 = vld [vmem:[#allocation7 + $0xc4] sm:$0xf]
    %v613 = vld [vmem:[#allocation7 + $0xc8] sm:$0xf]
    %v614 = vld [vmem:[#allocation7 + $0xcc] sm:$0xf]
    %v615 = vld [vmem:[#allocation7 + $0xd0] sm:$0xf]
    %v616 = vld [vmem:[#allocation7 + $0xd4] sm:$0xf]
    %v617 = vld [vmem:[#allocation7 + $0xd8] sm:$0xf]
    %v618 = vld [vmem:[#allocation7 + $0xdc] sm:$0xf]
    %v619 = vld [vmem:[#allocation7 + $0xe0] sm:$0xf]
    %v620 = vld [vmem:[#allocation7 + $0xe4] sm:$0xf]
    %v621 = vld [vmem:[#allocation7 + $0xe8] sm:$0xf]
    %v622 = vld [vmem:[#allocation7 + $0xec] sm:$0xf]
    %v623 = vld [vmem:[#allocation7 + $0xf0] sm:$0xf]
    %v624 = vld [vmem:[#allocation7 + $0xf4] sm:$0xf]
    %v625 = vld [vmem:[#allocation7 + $0xf8] sm:$0xf]
    %v626 = vld [vmem:[#allocation7 + $0xfc] sm:$0xf]
    %v627 = vld [vmem:[%s4] sm:$0x1]
    %v629 = vlaneseq
    %v630 = vshrl.u32 %v629, 7
    %v631 = vsub.s32 0, %v630
    %v632 = vrot.slane %v627, %v631
    %v698 = vunpack.c.l.b16 %v563
    %v699 = vunpack.c.l.b16 %v564
    %v700 = vunpack.c.l.b16 %v565
    %v701 = vunpack.c.l.b16 %v566
    %v702 = vunpack.c.l.b16 %v567
    %v703 = vunpack.c.l.b16 %v568
    %v704 = vunpack.c.l.b16 %v569
    %v705 = vunpack.c.l.b16 %v570
    %v706 = vunpack.c.l.b16 %v571
    %v707 = vunpack.c.l.b16 %v572
    %v708 = vunpack.c.l.b16 %v573
    %v709 = vunpack.c.l.b16 %v574
    %v710 = vunpack.c.l.b16 %v575
    %v711 = vunpack.c.l.b16 %v576
    %v712 = vunpack.c.l.b16 %v577
    %v713 = vunpack.c.l.b16 %v578
    %v714 = vunpack.c.l.b16 %v579
    %v715 = vunpack.c.l.b16 %v580
    %v716 = vunpack.c.l.b16 %v581
    %v717 = vunpack.c.l.b16 %v582
    %v718 = vunpack.c.l.b16 %v583
    %v719 = vunpack.c.l.b16 %v584
    %v720 = vunpack.c.l.b16 %v585
    %v721 = vunpack.c.l.b16 %v586
    %v722 = vunpack.c.l.b16 %v587
    %v723 = vunpack.c.l.b16 %v588
    %v724 = vunpack.c.l.b16 %v589
    %v725 = vunpack.c.l.b16 %v590
    %v726 = vunpack.c.l.b16 %v591
    %v727 = vunpack.c.l.b16 %v592
    %v728 = vunpack.c.l.b16 %v593
    %v729 = vunpack.c.l.b16 %v594
    %v730 = vunpack.c.l.b16 %v595
    %v731 = vunpack.c.l.b16 %v596
    %v732 = vunpack.c.l.b16 %v597
    %v733 = vunpack.c.l.b16 %v598
    %v734 = vunpack.c.l.b16 %v599
    %v735 = vunpack.c.l.b16 %v600
    %v736 = vunpack.c.l.b16 %v601
    %v737 = vunpack.c.l.b16 %v602
    %v738 = vunpack.c.l.b16 %v603
    %v739 = vunpack.c.l.b16 %v604
    %v740 = vunpack.c.l.b16 %v605
    %v741 = vunpack.c.l.b16 %v606
    %v742 = vunpack.c.l.b16 %v607
    %v743 = vunpack.c.l.b16 %v608
    %v744 = vunpack.c.l.b16 %v609
    %v745 = vunpack.c.l.b16 %v610
    %v746 = vunpack.c.l.b16 %v611
    %v747 = vunpack.c.l.b16 %v612
    %v748 = vunpack.c.l.b16 %v613
    %v749 = vunpack.c.l.b16 %v614
    %v750 = vunpack.c.l.b16 %v615
    %v751 = vunpack.c.l.b16 %v616
    %v752 = vunpack.c.l.b16 %v617
    %v753 = vunpack.c.l.b16 %v618
    %v754 = vunpack.c.l.b16 %v619
    %v755 = vunpack.c.l.b16 %v620
    %v756 = vunpack.c.l.b16 %v621
    %v757 = vunpack.c.l.b16 %v622
    %v758 = vunpack.c.l.b16 %v623
    %v759 = vunpack.c.l.b16 %v624
    %v760 = vunpack.c.l.b16 %v625
    %v761 = vunpack.c.l.b16 %v626
    %v762 = vpack.c.b16 %v699, %v698
    %v763 = vpack.c.b16 %v701, %v700
    %v764 = vpack.c.b16 %v703, %v702
    %v765 = vpack.c.b16 %v705, %v704
    %v766 = vpack.c.b16 %v707, %v706
    %v767 = vpack.c.b16 %v709, %v708
    %v768 = vpack.c.b16 %v711, %v710
    %v769 = vpack.c.b16 %v713, %v712
    %v770 = vpack.c.b16 %v715, %v714
    %v771 = vpack.c.b16 %v717, %v716
    %v772 = vpack.c.b16 %v719, %v718
    %v773 = vpack.c.b16 %v721, %v720
    %v774 = vpack.c.b16 %v723, %v722
    %v775 = vpack.c.b16 %v725, %v724
    %v776 = vpack.c.b16 %v727, %v726
    %v777 = vpack.c.b16 %v729, %v728
    %v778 = vpack.c.b16 %v731, %v730
    %v779 = vpack.c.b16 %v733, %v732
    %v780 = vpack.c.b16 %v735, %v734
    %v781 = vpack.c.b16 %v737, %v736
    %v782 = vpack.c.b16 %v739, %v738
    %v783 = vpack.c.b16 %v741, %v740
    %v784 = vpack.c.b16 %v743, %v742
    %v785 = vpack.c.b16 %v745, %v744
    %v786 = vpack.c.b16 %v747, %v746
    %v787 = vpack.c.b16 %v749, %v748
    %v788 = vpack.c.b16 %v751, %v750
    %v789 = vpack.c.b16 %v753, %v752
    %v790 = vpack.c.b16 %v755, %v754
    %v791 = vpack.c.b16 %v757, %v756
    %v792 = vpack.c.b16 %v759, %v758
    %v793 = vpack.c.b16 %v761, %v760
    %826 = vmatprep.subr.bf16.mxu0 0
    %827 = vmatpush1.bf16.msra.mxu0 %v762
    %828 = vmatprep.subr.bf16.mxu0 0
    %829 = vmatpush1.bf16.msra.mxu0 %v763
    %830 = vmatprep.subr.bf16.mxu0 0
    %831 = vmatpush1.bf16.msra.mxu0 %v764
    %832 = vmatprep.subr.bf16.mxu0 0
    %833 = vmatpush1.bf16.msra.mxu0 %v765
    %834 = vmatprep.subr.bf16.mxu0 0
    %835 = vmatpush1.bf16.msra.mxu0 %v766
    %836 = vmatprep.subr.bf16.mxu0 0
    %837 = vmatpush1.bf16.msra.mxu0 %v767
    %838 = vmatprep.subr.bf16.mxu0 0
    %839 = vmatpush1.bf16.msra.mxu0 %v768
    %840 = vmatprep.subr.bf16.mxu0 0
    %841 = vmatpush1.bf16.msra.mxu0 %v769
    %842 = vmatprep.subr.bf16.mxu0 0
    %843 = vmatpush1.bf16.msra.mxu0 %v770
    %844 = vmatprep.subr.bf16.mxu0 0
    %845 = vmatpush1.bf16.msra.mxu0 %v771
    %846 = vmatprep.subr.bf16.mxu0 0
    %847 = vmatpush1.bf16.msra.mxu0 %v772
    %848 = vmatprep.subr.bf16.mxu0 0
    %849 = vmatpush1.bf16.msra.mxu0 %v773
    %850 = vmatprep.subr.bf16.mxu0 0
    %851 = vmatpush1.bf16.msra.mxu0 %v774
    %852 = vmatprep.subr.bf16.mxu0 0
    %853 = vmatpush1.bf16.msra.mxu0 %v775
    %854 = vmatprep.subr.bf16.mxu0 0
    %855 = vmatpush1.bf16.msra.mxu0 %v776
    %856 = vmatprep.subr.bf16.mxu0 0
    %857 = vmatpush1.bf16.msra.mxu0 %v777
    %858 = vmatprep.mubr.bf16.mxu0 %v560
    %859 = vmatmul.mubr.bf16.gmra.mrb[0].mxu0 %v559
    %v860 = vpop.f32.mrb[0].mxu0
    %v861 = vadd.f32 %v632, %v860
    %v862 = vpop.f32.mrb[0].mxu0
    %v863 = vpop.f32.mrb[0].mxu0
    %v864 = vpop.f32.mrb[0].mxu0
    %865 = vdwg.mxu0
    %866 = vmatprep.subr.bf16.mxu0 0
    %867 = vmatpush1.bf16.msra.mxu0 %v778
    %868 = vmatprep.subr.bf16.mxu0 0
    %869 = vmatpush1.bf16.msra.mxu0 %v779
    %870 = vmatprep.subr.bf16.mxu0 0
    %871 = vmatpush1.bf16.msra.mxu0 %v780
    %872 = vmatprep.subr.bf16.mxu0 0
    %873 = vmatpush1.bf16.msra.mxu0 %v781
    %874 = vmatprep.subr.bf16.mxu0 0
    %875 = vmatpush1.bf16.msra.mxu0 %v782
    %876 = vmatprep.subr.bf16.mxu0 0
    %877 = vmatpush1.bf16.msra.mxu0 %v783
    %878 = vmatprep.subr.bf16.mxu0 0
    %879 = vmatpush1.bf16.msra.mxu0 %v784
    %880 = vmatprep.subr.bf16.mxu0 0
    %881 = vmatpush1.bf16.msra.mxu0 %v785
    %882 = vmatprep.subr.bf16.mxu0 0
    %883 = vmatpush1.bf16.msra.mxu0 %v786
    %884 = vmatprep.subr.bf16.mxu0 0
    %885 = vmatpush1.bf16.msra.mxu0 %v787
    %886 = vmatprep.subr.bf16.mxu0 0
    %887 = vmatpush1.bf16.msra.mxu0 %v788
    %888 = vmatprep.subr.bf16.mxu0 0
    %889 = vmatpush1.bf16.msra.mxu0 %v789
    %890 = vmatprep.subr.bf16.mxu0 0
    %891 = vmatpush1.bf16.msra.mxu0 %v790
    %892 = vmatprep.subr.bf16.mxu0 0
    %893 = vmatpush1.bf16.msra.mxu0 %v791
    %894 = vmatprep.subr.bf16.mxu0 0
    %895 = vmatpush1.bf16.msra.mxu0 %v792
    %896 = vmatprep.subr.bf16.mxu0 0
    %897 = vmatpush1.bf16.msra.mxu0 %v793
    %898 = vmatprep.mubr.bf16.mxu0 %v562
    %899 = vmatmul.mubr.bf16.gmra.mrb[0].mxu0 %v561
    %v900 = vpop.f32.mrb[0].mxu0
    %v901 = vadd.f32 %v861, %v900
    %v902 = vpop.f32.mrb[0].mxu0
    %v903 = vpop.f32.mrb[0].mxu0
    %v904 = vpop.f32.mrb[0].mxu0
    %905 = vdwg.mxu0
    %906 = vst [vmem:[#allocation8] sm:$0xff] %v901
    // Predicated region
    $region34: #{tpu_custom_call.1} parent=1 // pred_check
      _
    $region35: #{tpu_custom_call.1} parent=1 // pred_check_branch
      %908 = sbr.rel (0) target = $region37
    $region36: #{tpu_custom_call.1} parent=1 // pred_region
      %s910 = ssub.s32 128, 128
      %911 = vsyncadd [#allocation4], %s910
      %s913 = sshll.u32 [#allocation8], 4
      %s914 = int_to_ptr.vmem [resolvable:$true] %s913
      %916 = dma.vmem_to_hbm [thread:$0]  %s914, 128, %s5, [#allocation4]
    $region37: #{tpu_custom_call.1} parent=1 // pred_fallthru
      _
    // Predicated region
    $region38: #{tpu_custom_call.1} parent=1 // pred_check
      _
    $region39: #{tpu_custom_call.1} parent=1 // pred_check_branch
      %918 = sbr.rel (0) target = $region41
    $region40: #{tpu_custom_call.1} parent=1 // pred_region
      %919 = dma.done [#allocation4], 128
    $region41: #{tpu_custom_call.1} parent=1 // pred_fallthru
      _
    %920 = vsyncpa [#allocation3], 1
    %921 = vsyncpa [#allocation6], 1
    %922 = vsyncpa [#allocation4], 1

</llo_original>
